<compile_context>
chip_gen: v7x
topology: tpu7x:2x2x1
jax: 0.10.0
libtpu: 0.0.40
codegen_flags: <defaults>
</compile_context>

<pallas_src>
import functools

import numpy as np
import jax
import jax.numpy as jnp
from jax import lax
from jax.experimental import pallas as pl
from jax.experimental.pallas import tpu as pltpu


def _edsr_kernel(x_ref, w1_ref, w2_ref, mask_ref, o_ref, slab1_ref, slab2_ref,
                 *, H, W, res_scale):
    # x_ref    : (1, Cin, H*W)       activations, channel-major, spatial on lanes
    # w1_ref   : (C1, 9*Cin)         conv1 weight, tap-major / channel-minor columns
    # w2_ref   : (Cin, 9*C1)         conv2 weight
    # mask_ref : (9, H*W)            0/1 per-tap border masks (zero-padding)
    # o_ref    : (1, Cin, H*W)
    # slab1/2  : (9*Cin, H*W) / (9*C1, H*W)   im2col slabs in VMEM scratch
    HW = H * W
    taps = [(dh, dw) for dh in (-1, 0, 1) for dw in (-1, 0, 1)]

    x = x_ref[0]                     # (Cin, HW), compute dtype
    cdt = x.dtype

    def fill_slab(slab_ref, a):
        # a: (C, HW). Row block t of the slab holds the image shifted by tap
        # t = (dh, dw), with taps that fall outside the image zeroed.
        c = a.shape[0]
        d = jnp.concatenate([a, a], axis=1)          # (C, 2*HW), lane-aligned concat
        for t, (dh, dw) in enumerate(taps):
            if dh == 0 and dw == 0:
                r = a
            else:
                off = (dh * W + dw) % HW             # static offset in [0, HW)
                r = d[:, off:off + HW] * mask_ref[t:t + 1, :]
            slab_ref[t * c:(t + 1) * c, :] = r

    # ---- conv1: single MXU matmul, K = 9*Cin ----
    fill_slab(slab1_ref, x)
    acc1 = jnp.dot(w1_ref[...], slab1_ref[...],
                   preferred_element_type=jnp.float32)       # (C1, HW) f32
    mid = jnp.maximum(acc1, 0.0).astype(cdt)                 # ReLU

    # ---- conv2: single MXU matmul, K = 9*C1 ----
    fill_slab(slab2_ref, mid)
    acc2 = jnp.dot(w2_ref[...], slab2_ref[...],
                   preferred_element_type=jnp.float32)       # (Cin, HW) f32

    # ---- residual: * res_scale + x ----
    res = acc2 * res_scale + x.astype(jnp.float32)
    o_ref[0] = res.astype(o_ref.dtype)


def edsr_block_lite(x, w1, w2, res_scale=1.0):
    """x: (N, Cin, H, W) NCHW; w1: (C1, Cin, 3, 3), w2: (Cin, C1, 3, 3) (OIHW)."""
    N, Cin, H, W = x.shape
    C1 = w1.shape[0]
    assert w1.shape == (C1, Cin, 3, 3) and w2.shape == (Cin, C1, 3, 3)
    HW = H * W
    dt = x.dtype

    # Channel-major, spatial-flattened activations (free reshape; no pad/transpose).
    x2 = x.reshape(N, Cin, HW)

    # Pre-flatten weights to the exact matmul operand: (Cout, 9*Cin_k),
    # column index = tap*(Cin_k) + ci with tap = kh*3 + kw (matches slab rows).
    w1m = jnp.transpose(w1, (0, 2, 3, 1)).reshape(C1, 9 * Cin).astype(dt)
    w2m = jnp.transpose(w2, (0, 2, 3, 1)).reshape(Cin, 9 * C1).astype(dt)

    # Host-side constant 0/1 masks: mask[t, h*W + w] == 1 iff source pixel
    # (h+dh, w+dw) of tap t lies inside the image (implements the zero padding).
    hh, ww = np.meshgrid(np.arange(H), np.arange(W), indexing="ij")
    m = []
    for dh in (-1, 0, 1):
        for dw in (-1, 0, 1):
            valid = ((hh + dh >= 0) & (hh + dh < H) &
                     (ww + dw >= 0) & (ww + dw < W))
            m.append(valid.reshape(-1))
    tap_mask = jnp.asarray(np.stack(m).astype(np.float32), dtype=dt)   # (9, HW)

    kernel = functools.partial(_edsr_kernel, H=H, W=W, res_scale=float(res_scale))
    out = pl.pallas_call(
        kernel,
        out_shape=jax.ShapeDtypeStruct((N, Cin, HW), dt),
        grid_spec=pltpu.PrefetchScalarGridSpec(
            num_scalar_prefetch=0,
            grid=(N,),
            in_specs=[
                pl.BlockSpec((1, Cin, HW), lambda n: (n, 0, 0)),
                pl.BlockSpec((C1, 9 * Cin), lambda n: (0, 0)),
                pl.BlockSpec((Cin, 9 * C1), lambda n: (0, 0)),
                pl.BlockSpec((9, HW), lambda n: (0, 0)),
            ],
            out_specs=pl.BlockSpec((1, Cin, HW), lambda n: (n, 0, 0)),
            scratch_shapes=[
                pltpu.VMEM((9 * Cin, HW), dt),   # conv1 im2col slab
                pltpu.VMEM((9 * C1, HW), dt),    # conv2 im2col slab
            ],
        ),
        compiler_params=pltpu.CompilerParams(
            dimension_semantics=("parallel",)),   # v7x: shard batch over 2 TCs
    )(x2, w1m, w2m, tap_mask)

    return out.reshape(N, Cin, H, W)


def _reference(x, w1, w2, res_scale):
    # Pure-JAX reference (NCHW / OIHW convs) for the correctness check.
    dn = ("NCHW", "OIHW", "NCHW")
    r = lax.conv_general_dilated(x, w1, (1, 1), "SAME", dimension_numbers=dn,
                                 precision=lax.Precision.HIGHEST)
    r = jnp.maximum(r, 0.0)
    r = lax.conv_general_dilated(r, w2, (1, 1), "SAME", dimension_numbers=dn,
                                 precision=lax.Precision.HIGHEST)
    return r * res_scale + x


if __name__ == "__main__":
    N, Cin, H, W = 2, 4, 16, 16
    C1 = 8                      # out_planes = [C1, Cin]; out_planes[-1] == in_plane
    res_scale = 0.5

    key = jax.random.PRNGKey(0)
    kx, k1, k2 = jax.random.split(key, 3)
    x = jax.random.normal(kx, (N, Cin, H, W), jnp.float32)
    # deterministic synthetic weights in PyTorch OIHW layout, Kaiming-ish scale
    w1 = jax.random.normal(k1, (C1, Cin, 3, 3), jnp.float32) * (2.0 / (9 * Cin)) ** 0.5
    w2 = jax.random.normal(k2, (Cin, C1, 3, 3), jnp.float32) * (2.0 / (9 * C1)) ** 0.5

    # f32 path
    y = jax.block_until_ready(edsr_block_lite(x, w1, w2, res_scale=res_scale))
    y_ref = _reference(x, w1, w2, res_scale)
    assert y.shape == (N, Cin, H, W)
    assert jnp.allclose(y, y_ref, atol=1e-4, rtol=1e-4), "f32 mismatch vs reference"

    # bf16 path (native MXU dtype, half the HBM/VMEM traffic) with f32 accumulation
    xb, w1b, w2b = (t.astype(jnp.bfloat16) for t in (x, w1, w2))
    yb = jax.block_until_ready(edsr_block_lite(xb, w1b, w2b, res_scale=res_scale))
    yb_ref = _reference(xb.astype(jnp.float32), w1b.astype(jnp.float32),
                        w2b.astype(jnp.float32), res_scale)
    assert yb.shape == (N, Cin, H, W)
    assert jnp.allclose(yb.astype(jnp.float32), yb_ref, atol=1e-1, rtol=5e-2), \
        "bf16 mismatch vs reference"

    print("KERNEL_OK")
</pallas_src>

<mosaic_0001>
module attributes {stable_mosaic.version = 11 : i64} {
  func.func @_edsr_kernel(%arg0: i32, %arg1: memref<1x4x256xf32, #tpu.memory_space<vmem>>, %arg2: memref<8x36xf32, #tpu.memory_space<vmem>>, %arg3: memref<4x72xf32, #tpu.memory_space<vmem>>, %arg4: memref<9x256xf32, #tpu.memory_space<vmem>>, %arg5: memref<1x4x256xf32, #tpu.memory_space<vmem>>, %arg6: memref<36x256xf32, #tpu.memory_space<vmem>>, %arg7: memref<72x256xf32, #tpu.memory_space<vmem>>) attributes {dimension_semantics = [#tpu.dimension_semantics<parallel>], iteration_bounds = array<i64: 2>, scalar_prefetch = 0 : i64, scratch_operands = 2 : i64, tpu.core_type = #tpu.core_type<tc>, window_params = [{transform_indices = @transform_0, window_bounds = array<i64: 1, 4, 256>}, {pipeline_mode = #tpu.pipeline_mode<synchronous>, transform_indices = @transform_1, window_bounds = array<i64: 8, 36>}, {pipeline_mode = #tpu.pipeline_mode<synchronous>, transform_indices = @transform_2, window_bounds = array<i64: 4, 72>}, {pipeline_mode = #tpu.pipeline_mode<synchronous>, transform_indices = @transform_3, window_bounds = array<i64: 9, 256>}, {transform_indices = @transform_4, window_bounds = array<i64: 1, 4, 256>}]} {
    %c0 = arith.constant 0 : index
    %c0_0 = arith.constant 0 : index
    %c0_1 = arith.constant 0 : index
    %0 = vector.load %arg1[%c0, %c0_0, %c0_1] : memref<1x4x256xf32, #tpu.memory_space<vmem>>, vector<1x4x256xf32>
    %1 = vector.shape_cast %0 : vector<1x4x256xf32> to vector<4x256xf32>
    %2 = tpu.concatenate %1, %1 in 1 : vector<4x256xf32>, vector<4x256xf32> -> vector<4x512xf32>
    %3 = vector.extract_strided_slice %2 {offsets = [0, 239], sizes = [4, 256], strides = [1, 1]} : vector<4x512xf32> to vector<4x256xf32>
    %c0_2 = arith.constant 0 : index
    %c0_3 = arith.constant 0 : index
    %4 = vector.load %arg4[%c0_2, %c0_3] : memref<9x256xf32, #tpu.memory_space<vmem>>, vector<1x256xf32>
    %5 = vector.broadcast %4 : vector<1x256xf32> to vector<4x256xf32>
    %6 = arith.mulf %3, %5 : vector<4x256xf32>
    %c0_4 = arith.constant 0 : index
    %c0_5 = arith.constant 0 : index
    %7 = vector.load %arg6[%c0_4, %c0_5] : memref<36x256xf32, #tpu.memory_space<vmem>>, vector<4x256xf32>
    tpu.vector_store %arg6[%c0_4, %c0_5], %6 {strides = array<i32>} : memref<36x256xf32, #tpu.memory_space<vmem>>, vector<4x256xf32>,
    %8 = vector.extract_strided_slice %2 {offsets = [0, 240], sizes = [4, 256], strides = [1, 1]} : vector<4x512xf32> to vector<4x256xf32>
    %c1 = arith.constant 1 : index
    %c0_6 = arith.constant 0 : index
    %9 = vector.load %arg4[%c1, %c0_6] : memref<9x256xf32, #tpu.memory_space<vmem>>, vector<1x256xf32>
    %10 = vector.broadcast %9 : vector<1x256xf32> to vector<4x256xf32>
    %11 = arith.mulf %8, %10 : vector<4x256xf32>
    %c4 = arith.constant 4 : index
    %c0_7 = arith.constant 0 : index
    %12 = vector.load %arg6[%c4, %c0_7] : memref<36x256xf32, #tpu.memory_space<vmem>>, vector<4x256xf32>
    tpu.vector_store %arg6[%c4, %c0_7], %11 {strides = array<i32>} : memref<36x256xf32, #tpu.memory_space<vmem>>, vector<4x256xf32>,
    %13 = vector.extract_strided_slice %2 {offsets = [0, 241], sizes = [4, 256], strides = [1, 1]} : vector<4x512xf32> to vector<4x256xf32>
    %c2 = arith.constant 2 : index
    %c0_8 = arith.constant 0 : index
    %14 = vector.load %arg4[%c2, %c0_8] : memref<9x256xf32, #tpu.memory_space<vmem>>, vector<1x256xf32>
    %15 = vector.broadcast %14 : vector<1x256xf32> to vector<4x256xf32>
    %16 = arith.mulf %13, %15 : vector<4x256xf32>
    %c8 = arith.constant 8 : index
    %c0_9 = arith.constant 0 : index
    %17 = vector.load %arg6[%c8, %c0_9] : memref<36x256xf32, #tpu.memory_space<vmem>>, vector<4x256xf32>
    tpu.vector_store %arg6[%c8, %c0_9], %16 {strides = array<i32>} : memref<36x256xf32, #tpu.memory_space<vmem>>, vector<4x256xf32>,
    %18 = vector.extract_strided_slice %2 {offsets = [0, 255], sizes = [4, 256], strides = [1, 1]} : vector<4x512xf32> to vector<4x256xf32>
    %c3 = arith.constant 3 : index
    %c0_10 = arith.constant 0 : index
    %19 = vector.load %arg4[%c3, %c0_10] : memref<9x256xf32, #tpu.memory_space<vmem>>, vector<1x256xf32>
    %20 = vector.broadcast %19 : vector<1x256xf32> to vector<4x256xf32>
    %21 = arith.mulf %18, %20 : vector<4x256xf32>
    %c12 = arith.constant 12 : index
    %c0_11 = arith.constant 0 : index
    %22 = vector.load %arg6[%c12, %c0_11] : memref<36x256xf32, #tpu.memory_space<vmem>>, vector<4x256xf32>
    tpu.vector_store %arg6[%c12, %c0_11], %21 {strides = array<i32>} : memref<36x256xf32, #tpu.memory_space<vmem>>, vector<4x256xf32>,
    %c16 = arith.constant 16 : index
    %c0_12 = arith.constant 0 : index
    %23 = vector.load %arg6[%c16, %c0_12] : memref<36x256xf32, #tpu.memory_space<vmem>>, vector<4x256xf32>
    tpu.vector_store %arg6[%c16, %c0_12], %1 {strides = array<i32>} : memref<36x256xf32, #tpu.memory_space<vmem>>, vector<4x256xf32>,
    %24 = vector.extract_strided_slice %2 {offsets = [0, 1], sizes = [4, 256], strides = [1, 1]} : vector<4x512xf32> to vector<4x256xf32>
    %c5 = arith.constant 5 : index
    %c0_13 = arith.constant 0 : index
    %25 = vector.load %arg4[%c5, %c0_13] : memref<9x256xf32, #tpu.memory_space<vmem>>, vector<1x256xf32>
    %26 = vector.broadcast %25 : vector<1x256xf32> to vector<4x256xf32>
    %27 = arith.mulf %24, %26 : vector<4x256xf32>
    %c20 = arith.constant 20 : index
    %c0_14 = arith.constant 0 : index
    %28 = vector.load %arg6[%c20, %c0_14] : memref<36x256xf32, #tpu.memory_space<vmem>>, vector<4x256xf32>
    tpu.vector_store %arg6[%c20, %c0_14], %27 {strides = array<i32>} : memref<36x256xf32, #tpu.memory_space<vmem>>, vector<4x256xf32>,
    %29 = vector.extract_strided_slice %2 {offsets = [0, 15], sizes = [4, 256], strides = [1, 1]} : vector<4x512xf32> to vector<4x256xf32>
    %c6 = arith.constant 6 : index
    %c0_15 = arith.constant 0 : index
    %30 = vector.load %arg4[%c6, %c0_15] : memref<9x256xf32, #tpu.memory_space<vmem>>, vector<1x256xf32>
    %31 = vector.broadcast %30 : vector<1x256xf32> to vector<4x256xf32>
    %32 = arith.mulf %29, %31 : vector<4x256xf32>
    %c24 = arith.constant 24 : index
    %c0_16 = arith.constant 0 : index
    %33 = vector.load %arg6[%c24, %c0_16] : memref<36x256xf32, #tpu.memory_space<vmem>>, vector<4x256xf32>
    tpu.vector_store %arg6[%c24, %c0_16], %32 {strides = array<i32>} : memref<36x256xf32, #tpu.memory_space<vmem>>, vector<4x256xf32>,
    %34 = vector.extract_strided_slice %2 {offsets = [0, 16], sizes = [4, 256], strides = [1, 1]} : vector<4x512xf32> to vector<4x256xf32>
    %c7 = arith.constant 7 : index
    %c0_17 = arith.constant 0 : index
    %35 = vector.load %arg4[%c7, %c0_17] : memref<9x256xf32, #tpu.memory_space<vmem>>, vector<1x256xf32>
    %36 = vector.broadcast %35 : vector<1x256xf32> to vector<4x256xf32>
    %37 = arith.mulf %34, %36 : vector<4x256xf32>
    %c28 = arith.constant 28 : index
    %c0_18 = arith.constant 0 : index
    %38 = vector.load %arg6[%c28, %c0_18] : memref<36x256xf32, #tpu.memory_space<vmem>>, vector<4x256xf32>
    tpu.vector_store %arg6[%c28, %c0_18], %37 {strides = array<i32>} : memref<36x256xf32, #tpu.memory_space<vmem>>, vector<4x256xf32>,
    %39 = vector.extract_strided_slice %2 {offsets = [0, 17], sizes = [4, 256], strides = [1, 1]} : vector<4x512xf32> to vector<4x256xf32>
    %c8_19 = arith.constant 8 : index
    %c0_20 = arith.constant 0 : index
    %40 = vector.load %arg4[%c8_19, %c0_20] : memref<9x256xf32, #tpu.memory_space<vmem>>, vector<1x256xf32>
    %41 = vector.broadcast %40 : vector<1x256xf32> to vector<4x256xf32>
    %42 = arith.mulf %39, %41 : vector<4x256xf32>
    %c32 = arith.constant 32 : index
    %c0_21 = arith.constant 0 : index
    %43 = vector.load %arg6[%c32, %c0_21] : memref<36x256xf32, #tpu.memory_space<vmem>>, vector<4x256xf32>
    tpu.vector_store %arg6[%c32, %c0_21], %42 {strides = array<i32>} : memref<36x256xf32, #tpu.memory_space<vmem>>, vector<4x256xf32>,
    %c0_22 = arith.constant 0 : index
    %c0_23 = arith.constant 0 : index
    %44 = vector.load %arg2[%c0_22, %c0_23] : memref<8x36xf32, #tpu.memory_space<vmem>>, vector<8x36xf32>
    %c0_24 = arith.constant 0 : index
    %c0_25 = arith.constant 0 : index
    %45 = vector.load %arg6[%c0_24, %c0_25] : memref<36x256xf32, #tpu.memory_space<vmem>>, vector<36x256xf32>
    %cst = arith.constant dense<0.000000e+00> : vector<8x256xf32>
    %46 = tpu.matmul %44, %45, %cst {dimension_numbers = #tpu.dot_dimension_numbers<[1], [0], [0], [1], [0, 0, 1, 1], [], []>} : vector<8x36xf32>, vector<36x256xf32>, vector<8x256xf32> -> vector<8x256xf32>
    %cst_26 = arith.constant 0.000000e+00 : f32
    %47 = vector.broadcast %cst_26 : f32 to vector<8x256xf32>
    %48 = arith.maximumf %46, %47 : vector<8x256xf32>
    %49 = tpu.concatenate %48, %48 in 1 : vector<8x256xf32>, vector<8x256xf32> -> vector<8x512xf32>
    %50 = vector.extract_strided_slice %49 {offsets = [0, 239], sizes = [8, 256], strides = [1, 1]} : vector<8x512xf32> to vector<8x256xf32>
    %c0_27 = arith.constant 0 : index
    %c0_28 = arith.constant 0 : index
    %51 = vector.load %arg4[%c0_27, %c0_28] : memref<9x256xf32, #tpu.memory_space<vmem>>, vector<1x256xf32>
    %52 = vector.broadcast %51 : vector<1x256xf32> to vector<8x256xf32>
    %53 = arith.mulf %50, %52 : vector<8x256xf32>
    %c0_29 = arith.constant 0 : index
    %c0_30 = arith.constant 0 : index
    %54 = vector.load %arg7[%c0_29, %c0_30] : memref<72x256xf32, #tpu.memory_space<vmem>>, vector<8x256xf32>
    tpu.vector_store %arg7[%c0_29, %c0_30], %53 {strides = array<i32>} : memref<72x256xf32, #tpu.memory_space<vmem>>, vector<8x256xf32>,
    %55 = vector.extract_strided_slice %49 {offsets = [0, 240], sizes = [8, 256], strides = [1, 1]} : vector<8x512xf32> to vector<8x256xf32>
    %c1_31 = arith.constant 1 : index
    %c0_32 = arith.constant 0 : index
    %56 = vector.load %arg4[%c1_31, %c0_32] : memref<9x256xf32, #tpu.memory_space<vmem>>, vector<1x256xf32>
    %57 = vector.broadcast %56 : vector<1x256xf32> to vector<8x256xf32>
    %58 = arith.mulf %55, %57 : vector<8x256xf32>
    %c8_33 = arith.constant 8 : index
    %c0_34 = arith.constant 0 : index
    %59 = vector.load %arg7[%c8_33, %c0_34] : memref<72x256xf32, #tpu.memory_space<vmem>>, vector<8x256xf32>
    tpu.vector_store %arg7[%c8_33, %c0_34], %58 {strides = array<i32>} : memref<72x256xf32, #tpu.memory_space<vmem>>, vector<8x256xf32>,
    %60 = vector.extract_strided_slice %49 {offsets = [0, 241], sizes = [8, 256], strides = [1, 1]} : vector<8x512xf32> to vector<8x256xf32>
    %c2_35 = arith.constant 2 : index
    %c0_36 = arith.constant 0 : index
    %61 = vector.load %arg4[%c2_35, %c0_36] : memref<9x256xf32, #tpu.memory_space<vmem>>, vector<1x256xf32>
    %62 = vector.broadcast %61 : vector<1x256xf32> to vector<8x256xf32>
    %63 = arith.mulf %60, %62 : vector<8x256xf32>
    %c16_37 = arith.constant 16 : index
    %c0_38 = arith.constant 0 : index
    %64 = vector.load %arg7[%c16_37, %c0_38] : memref<72x256xf32, #tpu.memory_space<vmem>>, vector<8x256xf32>
    tpu.vector_store %arg7[%c16_37, %c0_38], %63 {strides = array<i32>} : memref<72x256xf32, #tpu.memory_space<vmem>>, vector<8x256xf32>,
    %65 = vector.extract_strided_slice %49 {offsets = [0, 255], sizes = [8, 256], strides = [1, 1]} : vector<8x512xf32> to vector<8x256xf32>
    %c3_39 = arith.constant 3 : index
    %c0_40 = arith.constant 0 : index
    %66 = vector.load %arg4[%c3_39, %c0_40] : memref<9x256xf32, #tpu.memory_space<vmem>>, vector<1x256xf32>
    %67 = vector.broadcast %66 : vector<1x256xf32> to vector<8x256xf32>
    %68 = arith.mulf %65, %67 : vector<8x256xf32>
    %c24_41 = arith.constant 24 : index
    %c0_42 = arith.constant 0 : index
    %69 = vector.load %arg7[%c24_41, %c0_42] : memref<72x256xf32, #tpu.memory_space<vmem>>, vector<8x256xf32>
    tpu.vector_store %arg7[%c24_41, %c0_42], %68 {strides = array<i32>} : memref<72x256xf32, #tpu.memory_space<vmem>>, vector<8x256xf32>,
    %c32_43 = arith.constant 32 : index
    %c0_44 = arith.constant 0 : index
    %70 = vector.load %arg7[%c32_43, %c0_44] : memref<72x256xf32, #tpu.memory_space<vmem>>, vector<8x256xf32>
    tpu.vector_store %arg7[%c32_43, %c0_44], %48 {strides = array<i32>} : memref<72x256xf32, #tpu.memory_space<vmem>>, vector<8x256xf32>,
    %71 = vector.extract_strided_slice %49 {offsets = [0, 1], sizes = [8, 256], strides = [1, 1]} : vector<8x512xf32> to vector<8x256xf32>
    %c5_45 = arith.constant 5 : index
    %c0_46 = arith.constant 0 : index
    %72 = vector.load %arg4[%c5_45, %c0_46] : memref<9x256xf32, #tpu.memory_space<vmem>>, vector<1x256xf32>
    %73 = vector.broadcast %72 : vector<1x256xf32> to vector<8x256xf32>
    %74 = arith.mulf %71, %73 : vector<8x256xf32>
    %c40 = arith.constant 40 : index
    %c0_47 = arith.constant 0 : index
    %75 = vector.load %arg7[%c40, %c0_47] : memref<72x256xf32, #tpu.memory_space<vmem>>, vector<8x256xf32>
    tpu.vector_store %arg7[%c40, %c0_47], %74 {strides = array<i32>} : memref<72x256xf32, #tpu.memory_space<vmem>>, vector<8x256xf32>,
    %76 = vector.extract_strided_slice %49 {offsets = [0, 15], sizes = [8, 256], strides = [1, 1]} : vector<8x512xf32> to vector<8x256xf32>
    %c6_48 = arith.constant 6 : index
    %c0_49 = arith.constant 0 : index
    %77 = vector.load %arg4[%c6_48, %c0_49] : memref<9x256xf32, #tpu.memory_space<vmem>>, vector<1x256xf32>
    %78 = vector.broadcast %77 : vector<1x256xf32> to vector<8x256xf32>
    %79 = arith.mulf %76, %78 : vector<8x256xf32>
    %c48 = arith.constant 48 : index
    %c0_50 = arith.constant 0 : index
    %80 = vector.load %arg7[%c48, %c0_50] : memref<72x256xf32, #tpu.memory_space<vmem>>, vector<8x256xf32>
    tpu.vector_store %arg7[%c48, %c0_50], %79 {strides = array<i32>} : memref<72x256xf32, #tpu.memory_space<vmem>>, vector<8x256xf32>,
    %81 = vector.extract_strided_slice %49 {offsets = [0, 16], sizes = [8, 256], strides = [1, 1]} : vector<8x512xf32> to vector<8x256xf32>
    %c7_51 = arith.constant 7 : index
    %c0_52 = arith.constant 0 : index
    %82 = vector.load %arg4[%c7_51, %c0_52] : memref<9x256xf32, #tpu.memory_space<vmem>>, vector<1x256xf32>
    %83 = vector.broadcast %82 : vector<1x256xf32> to vector<8x256xf32>
    %84 = arith.mulf %81, %83 : vector<8x256xf32>
    %c56 = arith.constant 56 : index
    %c0_53 = arith.constant 0 : index
    %85 = vector.load %arg7[%c56, %c0_53] : memref<72x256xf32, #tpu.memory_space<vmem>>, vector<8x256xf32>
    tpu.vector_store %arg7[%c56, %c0_53], %84 {strides = array<i32>} : memref<72x256xf32, #tpu.memory_space<vmem>>, vector<8x256xf32>,
    %86 = vector.extract_strided_slice %49 {offsets = [0, 17], sizes = [8, 256], strides = [1, 1]} : vector<8x512xf32> to vector<8x256xf32>
    %c8_54 = arith.constant 8 : index
    %c0_55 = arith.constant 0 : index
    %87 = vector.load %arg4[%c8_54, %c0_55] : memref<9x256xf32, #tpu.memory_space<vmem>>, vector<1x256xf32>
    %88 = vector.broadcast %87 : vector<1x256xf32> to vector<8x256xf32>
    %89 = arith.mulf %86, %88 : vector<8x256xf32>
    %c64 = arith.constant 64 : index
    %c0_56 = arith.constant 0 : index
    %90 = vector.load %arg7[%c64, %c0_56] : memref<72x256xf32, #tpu.memory_space<vmem>>, vector<8x256xf32>
    tpu.vector_store %arg7[%c64, %c0_56], %89 {strides = array<i32>} : memref<72x256xf32, #tpu.memory_space<vmem>>, vector<8x256xf32>,
    %c0_57 = arith.constant 0 : index
    %c0_58 = arith.constant 0 : index
    %91 = vector.load %arg3[%c0_57, %c0_58] : memref<4x72xf32, #tpu.memory_space<vmem>>, vector<4x72xf32>
    %c0_59 = arith.constant 0 : index
    %c0_60 = arith.constant 0 : index
    %92 = vector.load %arg7[%c0_59, %c0_60] : memref<72x256xf32, #tpu.memory_space<vmem>>, vector<72x256xf32>
    %cst_61 = arith.constant dense<0.000000e+00> : vector<4x256xf32>
    %93 = tpu.matmul %91, %92, %cst_61 {dimension_numbers = #tpu.dot_dimension_numbers<[1], [0], [0], [1], [0, 0, 1, 1], [], []>} : vector<4x72xf32>, vector<72x256xf32>, vector<4x256xf32> -> vector<4x256xf32>
    %cst_62 = arith.constant 5.000000e-01 : f32
    %94 = vector.broadcast %cst_62 : f32 to vector<4x256xf32>
    %95 = arith.mulf %93, %94 : vector<4x256xf32>
    %96 = arith.addf %95, %1 : vector<4x256xf32>
    %c0_63 = arith.constant 0 : index
    %c0_64 = arith.constant 0 : index
    %c0_65 = arith.constant 0 : index
    %97 = vector.load %arg5[%c0_63, %c0_64, %c0_65] : memref<1x4x256xf32, #tpu.memory_space<vmem>>, vector<1x4x256xf32>
    %98 = vector.shape_cast %97 : vector<1x4x256xf32> to vector<4x256xf32>
    %99 = vector.shape_cast %96 : vector<4x256xf32> to vector<1x4x256xf32>
    tpu.vector_store %arg5[%c0_63, %c0_64, %c0_65], %99 {strides = array<i32>} : memref<1x4x256xf32, #tpu.memory_space<vmem>>, vector<1x4x256xf32>,
    return
  }
  func.func @transform_0(%arg0: i32) -> (i32, i32, i32) {
    %c0_i32 = arith.constant 0 : i32
    %c0_i32_0 = arith.constant 0 : i32
    %c0_i32_1 = arith.constant 0 : i32
    return %arg0, %c0_i32, %c0_i32_0 : i32, i32, i32
  }
  func.func @transform_1(%arg0: i32) -> (i32, i32) {
    %c0_i32 = arith.constant 0 : i32
    %c0_i32_0 = arith.constant 0 : i32
    %c0_i32_1 = arith.constant 0 : i32
    return %c0_i32, %c0_i32_0 : i32, i32
  }
  func.func @transform_2(%arg0: i32) -> (i32, i32) {
    %c0_i32 = arith.constant 0 : i32
    %c0_i32_0 = arith.constant 0 : i32
    %c0_i32_1 = arith.constant 0 : i32
    return %c0_i32, %c0_i32_0 : i32, i32
  }
  func.func @transform_3(%arg0: i32) -> (i32, i32) {
    %c0_i32 = arith.constant 0 : i32
    %c0_i32_0 = arith.constant 0 : i32
    %c0_i32_1 = arith.constant 0 : i32
    return %c0_i32, %c0_i32_0 : i32, i32
  }
  func.func @transform_4(%arg0: i32) -> (i32, i32, i32) {
    %c0_i32 = arith.constant 0 : i32
    %c0_i32_0 = arith.constant 0 : i32
    %c0_i32_1 = arith.constant 0 : i32
    return %arg0, %c0_i32, %c0_i32_0 : i32, i32, i32
  }
}

</mosaic_0001>

<llo_original>
// kernel: tpu_custom_call.1
$region0: #{tpu_custom_call.1}
  #allocation0 [shape = 'u32[]', space=smem, size = 0x4, offset = 0x4, fixed_abs, tag = 'smem constant byte address 0x4 - core index']
  #allocation1 [shape = 'u32[144,128]{1,0:T(1,128)}', space=vmem, size = 0x12000, scoped, tag = 'internal scratch']
  #allocation2 [shape = 'f32[36,256]{1,0:T(8,128)}', space=vmem, size = 0xa000, scoped, tag = 'scratch operand']
  #allocation3 [shape = 'f32[72,256]{1,0:T(8,128)}', space=vmem, size = 0x12000, scoped, tag = 'scratch operand']
  %s0 = inlined_call_operand.hbm [shape: f32[2,4,256], index: 0, kind: input, shape index: {}]
  %s1 = inlined_call_operand.hbm [shape: f32[8,36], index: 1, kind: input, shape index: {}]
  %s2 = inlined_call_operand.vmem [shape: f32[4,72], index: 2, kind: input, shape index: {}]
  %s3 = inlined_call_operand.hbm [shape: f32[9,256], index: 3, kind: input, shape index: {}]
  %s4 = inlined_call_operand.hbm [shape: f32[2,4,256], index: 4, kind: output, shape index: {}]
  %s5 = sld [smem:[#allocation0]]
  $region61: #{tpu_custom_call.1} parent=0
    _
  %s7 = ssub.s32 1, %s5
  %s8 = scalar_select 0, %s7, %s5
  $region1: #{tpu_custom_call.1} parent=0
    #allocation4 [shape = 'u8[8192]{0}', space=vmem, size = 0x2000, scoped, tag = 'input window, operand 0']
    #allocation5 [shape = 's32[2]{0}', space=sflag, size = 0x8, scoped, tag = 'scoped memory for tpu_custom_call.1']
    #allocation6 [shape = 's32[2]{0}', space=sflag, size = 0x8, scoped, tag = 'scoped memory for tpu_custom_call.1']
    #allocation7 [shape = 'u8[4096]{0}', space=vmem, size = 0x1000, scoped, tag = 'input window, operand 1, single buffered']
    #allocation8 [shape = 's32[1]{0}', space=sflag, size = 0x4, scoped, tag = 'scoped memory for tpu_custom_call.1']
    #allocation9 [shape = 'u8[16384]{0}', space=vmem, size = 0x4000, scoped, tag = 'input window, operand 3, single buffered']
    #allocation10 [shape = 'u8[8192]{0}', space=vmem, size = 0x2000, scoped, tag = 'output window, operand 0']
    %9 = vsyncpa [#allocation5], 0
    %s10 = scalar_lea.sflag [#allocation5], 1
    %11 = vsyncpa %s10, 0
    %12 = vsyncpa [#allocation8], 0
    %13 = vsyncpa [#allocation6], 0
    %s14 = scalar_lea.sflag [#allocation6], 1
    %15 = vsyncpa %s14, 0
    loop: start=0, step=1, limit=4
    $region2: #{tpu_custom_call.1} parent=1 // loop_pre_header
      _
    $region3: #{tpu_custom_call.1} parent=1 // loop_header
      %s17 = sphi 0, %s21
      %p18 = scmp.ge.s32.totalorder %s17, 4
      %s27 = sphi 0, %s29
      %s30 = sphi 0, %s27
      %s31 = sphi 0, %s30
      %s47 = sphi 0, %s31
      %s51 = sphi 0, %s51
      %s53 = sphi 0, %s51
      %s54 = sphi 0, %s53
      %s68 = sphi 0, %s54
      %s72 = sphi 0, %s72
      %s74 = sphi 0, %s72
      %s75 = sphi 0, %s74
      %s89 = sphi 0, %s75
      %s93 = sphi 0, %s93
      %s95 = sphi 0, %s93
      %s96 = sphi 0, %s95
      %s110 = sphi 0, %s96
      %s116 = sphi 0, %s118
      %s119 = sphi 0, %s116
      %s120 = sphi 0, %s119
      %s136 = sphi 0, %s120
    $region4: #{tpu_custom_call.1} parent=1 // loop_header_branch
      %20 = sbr.rel (%p18) target = $region8
    $region5: #{tpu_custom_call.1} parent=1 // loop_body
      %s22 = ssub.s32 %s17, 1
      %s23 = ssub.s32 %s17, 2
      %s24 = sadd.s32 %s17, 1
      %s25 = ssub.s32 %s17, %s24
      %p26 = scmp.eq.s32.totalorder %s25, 0
      %s28 = sadd.s32 %s27, 1
      %s29 = scalar_select %p26, %s27, %s28
      %p32 = pneg %p26
      %p33 = scmp.eq.s32.totalorder %s17, 1
      %p34 = por %p32, %p33
      %p35 = scmp.ne.s32.totalorder %s27, %s30
      %p36 = scmp.eq.s32.totalorder %s17, 0
      %p37 = por %p35, %p36
      %p38 = scmp.ne.s32.totalorder %s27, %s30
      %p39 = scmp.eq.s32.totalorder %s22, 1
      %p40 = por %p38, %p39
      %p41 = scmp.ne.s32.totalorder %s30, %s31
      %p42 = scmp.eq.s32.totalorder %s22, 0
      %p43 = por %p41, %p42
      %p44 = scmp.ne.s32.totalorder %s30, %s31
      %p45 = scmp.eq.s32.totalorder %s23, 1
      %p46 = por %p44, %p45
      %p48 = scmp.ne.s32.totalorder %s31, %s47
      %p49 = scmp.eq.s32.totalorder %s23, 0
      %p50 = por %p48, %p49
      %s52 = sadd.s32 %s51, 1
      %p55 = scmp.eq.s32.totalorder %s17, 1
      %p56 = scmp.ne.s32.totalorder %s51, %s53
      %p57 = scmp.eq.s32.totalorder %s17, 0
      %p58 = por %p56, %p57
      %p59 = scmp.ne.s32.totalorder %s51, %s53
      %p60 = scmp.eq.s32.totalorder %s22, 1
      %p61 = por %p59, %p60
      %p62 = scmp.ne.s32.totalorder %s53, %s54
      %p63 = scmp.eq.s32.totalorder %s22, 0
      %p64 = por %p62, %p63
      %p65 = scmp.ne.s32.totalorder %s53, %s54
      %p66 = scmp.eq.s32.totalorder %s23, 1
      %p67 = por %p65, %p66
      %p69 = scmp.ne.s32.totalorder %s54, %s68
      %p70 = scmp.eq.s32.totalorder %s23, 0
      %p71 = por %p69, %p70
      %s73 = sadd.s32 %s72, 1
      %p76 = scmp.eq.s32.totalorder %s17, 1
      %p77 = scmp.ne.s32.totalorder %s72, %s74
      %p78 = scmp.eq.s32.totalorder %s17, 0
      %p79 = por %p77, %p78
      %p80 = scmp.ne.s32.totalorder %s72, %s74
      %p81 = scmp.eq.s32.totalorder %s22, 1
      %p82 = por %p80, %p81
      %p83 = scmp.ne.s32.totalorder %s74, %s75
      %p84 = scmp.eq.s32.totalorder %s22, 0
      %p85 = por %p83, %p84
      %p86 = scmp.ne.s32.totalorder %s74, %s75
      %p87 = scmp.eq.s32.totalorder %s23, 1
      %p88 = por %p86, %p87
      %p90 = scmp.ne.s32.totalorder %s75, %s89
      %p91 = scmp.eq.s32.totalorder %s23, 0
      %p92 = por %p90, %p91
      %s94 = sadd.s32 %s93, 1
      %p97 = scmp.eq.s32.totalorder %s17, 1
      %p98 = scmp.ne.s32.totalorder %s93, %s95
      %p99 = scmp.eq.s32.totalorder %s17, 0
      %p100 = por %p98, %p99
      %p101 = scmp.ne.s32.totalorder %s93, %s95
      %p102 = scmp.eq.s32.totalorder %s22, 1
      %p103 = por %p101, %p102
      %p104 = scmp.ne.s32.totalorder %s95, %s96
      %p105 = scmp.eq.s32.totalorder %s22, 0
      %p106 = por %p104, %p105
      %p107 = scmp.ne.s32.totalorder %s95, %s96
      %p108 = scmp.eq.s32.totalorder %s23, 1
      %p109 = por %p107, %p108
      %p111 = scmp.ne.s32.totalorder %s96, %s110
      %p112 = scmp.eq.s32.totalorder %s23, 0
      %p113 = por %p111, %p112
      %s114 = ssub.s32 %s17, %s24
      %p115 = scmp.eq.s32.totalorder %s114, 0
      %s117 = sadd.s32 %s116, 1
      %s118 = scalar_select %p115, %s116, %s117
      %p121 = pneg %p115
      %p122 = scmp.eq.s32.totalorder %s17, 1
      %p123 = por %p121, %p122
      %p124 = scmp.ne.s32.totalorder %s116, %s119
      %p125 = scmp.eq.s32.totalorder %s17, 0
      %p126 = por %p124, %p125
      %p127 = scmp.ne.s32.totalorder %s116, %s119
      %p128 = scmp.eq.s32.totalorder %s22, 1
      %p129 = por %p127, %p128
      %p130 = scmp.ne.s32.totalorder %s119, %s120
      %p131 = scmp.eq.s32.totalorder %s22, 0
      %p132 = por %p130, %p131
      %p133 = scmp.ne.s32.totalorder %s119, %s120
      %p134 = scmp.eq.s32.totalorder %s23, 1
      %p135 = por %p133, %p134
      %p137 = scmp.ne.s32.totalorder %s120, %s136
      %p138 = scmp.eq.s32.totalorder %s23, 0
      %p139 = por %p137, %p138
      %p140 = scmp.le.s32.totalorder 1, %s17
      %p141 = scmp.lt.s32.totalorder %s17, 3
      %p142 = pnand %p140, %p141
      %p143 = pneg %p142
      // Predicated region
      $region9: #{tpu_custom_call.1} parent=5 // pred_check
        _
      $region10: #{tpu_custom_call.1} parent=5 // pred_check_branch
        %145 = sbr.rel (%p142) target = $region12
      $region11: #{tpu_custom_call.1} parent=5 // pred_region
        %s146 = ssub.s32 %s17, 1
        // Predicated region
        $region13: #{tpu_custom_call.1} parent=11 // pred_check
          %p147 = pneg %p64
        $region14: #{tpu_custom_call.1} parent=11 // pred_check_branch
          %149 = sbr.rel (%p147) target = $region16
        $region15: #{tpu_custom_call.1} parent=11 // pred_region
          %s151 = ssub.s32 128, 128
          %152 = vsyncadd [#allocation8], %s151
          %s154 = sshll.u32 [#allocation7], 4
          %s155 = int_to_ptr.vmem [resolvable:$true] %s154
          %157 = dma.hbm_to_vmem [thread:$0]  %s1, 128, %s155, [#allocation8]
        $region16: #{tpu_custom_call.1} parent=11 // pred_fallthru
          _
        // Predicated region
        $region17: #{tpu_custom_call.1} parent=11 // pred_check
          %p158 = pneg %p85
        $region18: #{tpu_custom_call.1} parent=11 // pred_check_branch
          %160 = sbr.rel (%p158) target = $region20
        $region19: #{tpu_custom_call.1} parent=11 // pred_region
          _
        $region20: #{tpu_custom_call.1} parent=11 // pred_fallthru
          _
        // Predicated region
        $region21: #{tpu_custom_call.1} parent=11 // pred_check
          %p161 = pneg %p106
        $region22: #{tpu_custom_call.1} parent=11 // pred_check_branch
          %163 = sbr.rel (%p161) target = $region24
        $region23: #{tpu_custom_call.1} parent=11 // pred_region
          %s165 = ssub.s32 512, 512
          %166 = vsyncadd [#allocation8], %s165
          %s167 = sshll.u32 [#allocation9], 4
          %s168 = int_to_ptr.vmem [resolvable:$true] %s167
          %173 = dma.hbm_to_vmem [thread:$0]  %s3, 512, %s168, [#allocation8], 256, 256, 16
        $region24: #{tpu_custom_call.1} parent=11 // pred_fallthru
          _
      $region12: #{tpu_custom_call.1} parent=5 // pred_fallthru
        _
      %p174 = scmp.lt.s32.totalorder %s17, 2
      // Predicated region
      $region25: #{tpu_custom_call.1} parent=5 // pred_check
        %p175 = pneg %p174
      $region26: #{tpu_custom_call.1} parent=5 // pred_check_branch
        %177 = sbr.rel (%p175) target = $region28
      $region27: #{tpu_custom_call.1} parent=5 // pred_region
        // Predicated region
        $region29: #{tpu_custom_call.1} parent=27 // pred_check
          %p178 = pneg %p37
        $region30: #{tpu_custom_call.1} parent=27 // pred_check_branch
          %180 = sbr.rel (%p178) target = $region32
        $region31: #{tpu_custom_call.1} parent=27 // pred_region
          %s181 = sand.u32 %s27, 1
          %s182 = scalar_lea.sflag [#allocation5], %s181
          %s183 = sand.u32 %s27, 1
          %s184 = smul.addr %s183, 8
          %s185 = scalar_lea.vmem [#allocation4], %s184
          %s187 = ssub.s32 128, 128
          %188 = vsyncadd %s182, %s187
          %s189 = smul.addr %s17, 2
          %s190 = smul.addr %s189, 64
          %s191 = scalar_lea.hbm %s0, %s190
          %s193 = sshll.u32 %s185, 4
          %s194 = int_to_ptr.vmem [resolvable:$true] %s193
          %196 = dma.hbm_to_vmem [thread:$0]  %s191, 128, %s194, %s182
        $region32: #{tpu_custom_call.1} parent=27 // pred_fallthru
          _
      $region28: #{tpu_custom_call.1} parent=5 // pred_fallthru
        _
      %p197 = scmp.le.s32.totalorder 1, %s17
      %p198 = scmp.lt.s32.totalorder %s17, 3
      %p199 = pnand %p197, %p198
      %p200 = pneg %p199
      // Predicated region
      $region33: #{tpu_custom_call.1} parent=5 // pred_check
        _
      $region34: #{tpu_custom_call.1} parent=5 // pred_check_branch
        %202 = sbr.rel (%p199) target = $region36
      $region35: #{tpu_custom_call.1} parent=5 // pred_region
        %s203 = ssub.s32 %s17, 1
        %s204 = sand.u32 %s30, 1
        %s205 = scalar_lea.sflag [#allocation5], %s204
        %s206 = sand.u32 %s30, 1
        %s207 = smul.addr %s206, 8
        %s208 = scalar_lea.vmem [#allocation4], %s207
        // Predicated region
        $region37: #{tpu_custom_call.1} parent=35 // pred_check
          %p209 = pneg %p43
        $region38: #{tpu_custom_call.1} parent=35 // pred_check_branch
          %211 = sbr.rel (%p209) target = $region40
        $region39: #{tpu_custom_call.1} parent=35 // pred_region
          %212 = dma.done %s205, 128
        $region40: #{tpu_custom_call.1} parent=35 // pred_fallthru
          _
        // Predicated region
        $region41: #{tpu_custom_call.1} parent=35 // pred_check
          %p213 = pneg %p64
        $region42: #{tpu_custom_call.1} parent=35 // pred_check_branch
          %215 = sbr.rel (%p213) target = $region44
        $region43: #{tpu_custom_call.1} parent=35 // pred_region
          %216 = dma.done [#allocation8], 128
        $region44: #{tpu_custom_call.1} parent=35 // pred_fallthru
          _
        // Predicated region
        $region45: #{tpu_custom_call.1} parent=35 // pred_check
          %p217 = pneg %p106
        $region46: #{tpu_custom_call.1} parent=35 // pred_check_branch
          %219 = sbr.rel (%p217) target = $region48
        $region47: #{tpu_custom_call.1} parent=35 // pred_region
          %220 = dma.done [#allocation8], 512
        $region48: #{tpu_custom_call.1} parent=35 // pred_fallthru
          _
        %s221 = sand.u32 %s30, 1
        %s222 = scalar_lea.sflag [#allocation5], %s221
        %s223 = sand.u32 %s30, 1
        %s224 = smul.addr %s223, 8
        %s225 = scalar_lea.vmem [#allocation4], %s224
        %p226 = pneg %p43
        %p227 = pneg %p40
        %p228 = pneg %p64
        %p229 = pneg %p61
        %p230 = pneg %p85
        %p231 = pneg %p82
        %p232 = pneg %p106
        %p233 = pneg %p103
        %p234 = pneg %p132
        %p235 = pneg %p129
        %s236 = sand.u32 %s119, 1
        %s237 = scalar_lea.sflag [#allocation6], %s236
        %s238 = sand.u32 %s119, 1
        %s239 = smul.addr %s238, 8
        %s240 = scalar_lea.vmem [#allocation10], %s239
        %v241 = vld [vmem:[%s208] sm:$0xff]
        %v243 = vcombine.high %v241, %v241
        %v245 = vld [vmem:[#allocation9] ss:$8 sm:$0x3]
        %v247 = vlaneseq
        %v248 = vshrl.u32 %v247, 7
        %v249 = vsub.s32 0, %v248
        %v250 = vrot.slane %v245, %v249
        %v251 = vlaneseq
        %v252 = vshrl.u32 %v251, 7
        %v253 = vsub.s32 1, %v252
        %v254 = vrot.slane %v245, %v253
        %255 = vrot.lane.b32.xlu0 %v250, 111
        %v256 = vpop.permute.xlu0 %255
        %257 = vrot.lane.b32.xlu0 %v254, 111
        %v258 = vpop.permute.xlu0 %257
        %vm259 = vcmask 908288
        %v260 = vsel %vm259, %v256, %v258
        %v264 = vmul.f32 %v243, %v256
        %v265 = vmul.f32 %v241, %v260
        %v266 = vmul.f32 %v243, %v258
        %270 = vrot.lane.b32.xlu0 %v264, 17
        %v271 = vpop.permute.xlu0 %270
        %272 = vrot.lane.b32.xlu0 %v265, 17
        %v273 = vpop.permute.xlu0 %272
        %274 = vrot.lane.b32.xlu0 %v266, 17
        %v275 = vpop.permute.xlu0 %274
        %vm276 = vcmask 138240
        %v277 = vsel %vm276, %v271, %v273
        %v278 = vsel %vm276, %v273, %v275
        %281 = vst [vmem:[#allocation2] sm:$0xf] %v277
        %282 = vst [vmem:[#allocation2 + $0x8] sm:$0xf] %v278
        %s283 = scalar_lea.vmem [#allocation9], 1
        %v284 = vld [vmem:[%s283] ss:$8 sm:$0x3]
        %v286 = vlaneseq
        %v287 = vshrl.u32 %v286, 7
        %v288 = vsub.s32 0, %v287
        %v289 = vrot.slane %v284, %v288
        %v290 = vlaneseq
        %v291 = vshrl.u32 %v290, 7
        %v292 = vsub.s32 1, %v291
        %v293 = vrot.slane %v284, %v292
        %294 = vrot.lane.b32.xlu0 %v289, 112
        %v295 = vpop.permute.xlu0 %294
        %296 = vrot.lane.b32.xlu0 %v293, 112
        %v297 = vpop.permute.xlu0 %296
        %vm298 = vcmask 916480
        %v299 = vsel %vm298, %v295, %v297
        %v303 = vmul.f32 %v243, %v295
        %v304 = vmul.f32 %v241, %v299
        %v305 = vmul.f32 %v243, %v297
        %v309 = vrot.slane %v303, 4
        %v310 = vrot.slane %v304, 4
        %v311 = vrot.slane %v305, 4
        %312 = vrot.lane.b32.xlu0 %v309, 16
        %v313 = vpop.permute.xlu0 %312
        %314 = vrot.lane.b32.xlu0 %v310, 16
        %v315 = vpop.permute.xlu0 %314
        %316 = vrot.lane.b32.xlu0 %v311, 16
        %v317 = vpop.permute.xlu0 %316
        %vm318 = vcmask 130048
        %v319 = vsel %vm318, %v313, %v315
        %v320 = vsel %vm318, %v315, %v317
        %323 = vst [vmem:[#allocation2] sm:$0xf0] %v319
        %324 = vst [vmem:[#allocation2 + $0x8] sm:$0xf0] %v320
        %s325 = scalar_lea.vmem [#allocation9], 2
        %v326 = vld [vmem:[%s325] ss:$8 sm:$0x3]
        %v328 = vlaneseq
        %v329 = vshrl.u32 %v328, 7
        %v330 = vsub.s32 0, %v329
        %v331 = vrot.slane %v326, %v330
        %v332 = vlaneseq
        %v333 = vshrl.u32 %v332, 7
        %v334 = vsub.s32 1, %v333
        %v335 = vrot.slane %v326, %v334
        %336 = vrot.lane.b32.xlu0 %v331, 113
        %v337 = vpop.permute.xlu0 %336
        %338 = vrot.lane.b32.xlu0 %v335, 113
        %v339 = vpop.permute.xlu0 %338
        %vm340 = vcmask 924672
        %v341 = vsel %vm340, %v337, %v339
        %v345 = vmul.f32 %v243, %v337
        %v346 = vmul.f32 %v241, %v341
        %v347 = vmul.f32 %v243, %v339
        %351 = vrot.lane.b32.xlu0 %v345, 15
        %v352 = vpop.permute.xlu0 %351
        %353 = vrot.lane.b32.xlu0 %v346, 15
        %v354 = vpop.permute.xlu0 %353
        %355 = vrot.lane.b32.xlu0 %v347, 15
        %v356 = vpop.permute.xlu0 %355
        %vm357 = vcmask 121856
        %v358 = vsel %vm357, %v352, %v354
        %v359 = vsel %vm357, %v354, %v356
        %362 = vst [vmem:[#allocation2 + $0x10] sm:$0xf] %v358
        %363 = vst [vmem:[#allocation2 + $0x18] sm:$0xf] %v359
        %s364 = scalar_lea.vmem [#allocation9], 3
        %v365 = vld [vmem:[%s364] ss:$8 sm:$0x3]
        %v367 = vlaneseq
        %v368 = vshrl.u32 %v367, 7
        %v369 = vsub.s32 0, %v368
        %v370 = vrot.slane %v365, %v369
        %v371 = vlaneseq
        %v372 = vshrl.u32 %v371, 7
        %v373 = vsub.s32 1, %v372
        %v374 = vrot.slane %v365, %v373
        %375 = vrot.lane.b32.xlu0 %v370, 127
        %v376 = vpop.permute.xlu0 %375
        %377 = vrot.lane.b32.xlu0 %v374, 127
        %v378 = vpop.permute.xlu0 %377
        %vm379 = vcmask 1039360
        %v380 = vsel %vm379, %v376, %v378
        %v384 = vmul.f32 %v243, %v376
        %v385 = vmul.f32 %v241, %v380
        %v386 = vmul.f32 %v243, %v378
        %v390 = vrot.slane %v384, 4
        %v391 = vrot.slane %v385, 4
        %v392 = vrot.slane %v386, 4
        %393 = vrot.lane.b32.xlu0 %v390, 1
        %v394 = vpop.permute.xlu0 %393
        %395 = vrot.lane.b32.xlu0 %v391, 1
        %v396 = vpop.permute.xlu0 %395
        %397 = vrot.lane.b32.xlu0 %v392, 1
        %v398 = vpop.permute.xlu0 %397
        %vm399 = vcmask 7168
        %v400 = vsel %vm399, %v394, %v396
        %v401 = vsel %vm399, %v396, %v398
        %404 = vst [vmem:[#allocation2 + $0x10] sm:$0xf0] %v400
        %405 = vst [vmem:[#allocation2 + $0x18] sm:$0xf0] %v401
        %406 = vst [vmem:[#allocation2 + $0x20] sm:$0xf] %v241
        %407 = vst [vmem:[#allocation2 + $0x28] sm:$0xf] %v243
        %s408 = scalar_lea.vmem [#allocation9], 5
        %v409 = vld [vmem:[%s408] ss:$8 sm:$0x3]
        %v411 = vlaneseq
        %v412 = vshrl.u32 %v411, 7
        %v413 = vsub.s32 0, %v412
        %v414 = vrot.slane %v409, %v413
        %v415 = vlaneseq
        %v416 = vshrl.u32 %v415, 7
        %v417 = vsub.s32 1, %v416
        %v418 = vrot.slane %v409, %v417
        %419 = vrot.lane.b32.xlu0 %v414, 1
        %v420 = vpop.permute.xlu0 %419
        %421 = vrot.lane.b32.xlu0 %v418, 1
        %v422 = vpop.permute.xlu0 %421
        %v423 = vsel %vm399, %v420, %v422
        %v427 = vmul.f32 %v241, %v420
        %v428 = vmul.f32 %v243, %v423
        %v429 = vmul.f32 %v241, %v422
        %v433 = vrot.slane %v427, 4
        %v434 = vrot.slane %v428, 4
        %v435 = vrot.slane %v429, 4
        %436 = vrot.lane.b32.xlu0 %v433, 127
        %v437 = vpop.permute.xlu0 %436
        %438 = vrot.lane.b32.xlu0 %v434, 127
        %v439 = vpop.permute.xlu0 %438
        %440 = vrot.lane.b32.xlu0 %v435, 127
        %v441 = vpop.permute.xlu0 %440
        %v442 = vsel %vm379, %v437, %v439
        %v443 = vsel %vm379, %v439, %v441
        %446 = vst [vmem:[#allocation2 + $0x20] sm:$0xf0] %v442
        %447 = vst [vmem:[#allocation2 + $0x28] sm:$0xf0] %v443
        %s448 = scalar_lea.vmem [#allocation9], 6
        %v449 = vld [vmem:[%s448] ss:$8 sm:$0x3]
        %v451 = vlaneseq
        %v452 = vshrl.u32 %v451, 7
        %v453 = vsub.s32 0, %v452
        %v454 = vrot.slane %v449, %v453
        %v455 = vlaneseq
        %v456 = vshrl.u32 %v455, 7
        %v457 = vsub.s32 1, %v456
        %v458 = vrot.slane %v449, %v457
        %459 = vrot.lane.b32.xlu0 %v454, 15
        %v460 = vpop.permute.xlu0 %459
        %461 = vrot.lane.b32.xlu0 %v458, 15
        %v462 = vpop.permute.xlu0 %461
        %v463 = vsel %vm357, %v460, %v462
        %v467 = vmul.f32 %v241, %v460
        %v468 = vmul.f32 %v243, %v463
        %v469 = vmul.f32 %v241, %v462
        %473 = vrot.lane.b32.xlu0 %v467, 113
        %v474 = vpop.permute.xlu0 %473
        %475 = vrot.lane.b32.xlu0 %v468, 113
        %v476 = vpop.permute.xlu0 %475
        %477 = vrot.lane.b32.xlu0 %v469, 113
        %v478 = vpop.permute.xlu0 %477
        %v479 = vsel %vm340, %v474, %v476
        %v480 = vsel %vm340, %v476, %v478
        %483 = vst [vmem:[#allocation2 + $0x30] sm:$0xf] %v479
        %484 = vst [vmem:[#allocation2 + $0x38] sm:$0xf] %v480
        %s485 = scalar_lea.vmem [#allocation9], 7
        %v486 = vld [vmem:[%s485] ss:$8 sm:$0x3]
        %v488 = vlaneseq
        %v489 = vshrl.u32 %v488, 7
        %v490 = vsub.s32 0, %v489
        %v491 = vrot.slane %v486, %v490
        %v492 = vlaneseq
        %v493 = vshrl.u32 %v492, 7
        %v494 = vsub.s32 1, %v493
        %v495 = vrot.slane %v486, %v494
        %496 = vrot.lane.b32.xlu0 %v491, 16
        %v497 = vpop.permute.xlu0 %496
        %498 = vrot.lane.b32.xlu0 %v495, 16
        %v499 = vpop.permute.xlu0 %498
        %v500 = vsel %vm318, %v497, %v499
        %v504 = vmul.f32 %v241, %v497
        %v505 = vmul.f32 %v243, %v500
        %v506 = vmul.f32 %v241, %v499
        %v510 = vrot.slane %v504, 4
        %v511 = vrot.slane %v505, 4
        %v512 = vrot.slane %v506, 4
        %513 = vrot.lane.b32.xlu0 %v510, 112
        %v514 = vpop.permute.xlu0 %513
        %515 = vrot.lane.b32.xlu0 %v511, 112
        %v516 = vpop.permute.xlu0 %515
        %517 = vrot.lane.b32.xlu0 %v512, 112
        %v518 = vpop.permute.xlu0 %517
        %v519 = vsel %vm298, %v514, %v516
        %v520 = vsel %vm298, %v516, %v518
        %523 = vst [vmem:[#allocation2 + $0x30] sm:$0xf0] %v519
        %524 = vst [vmem:[#allocation2 + $0x38] sm:$0xf0] %v520
        %s525 = scalar_lea.vmem [#allocation9], 16
        %v526 = vld [vmem:[%s525] ss:$8 sm:$0x3]
        %v528 = vlaneseq
        %v529 = vshrl.u32 %v528, 7
        %v530 = vsub.s32 0, %v529
        %v531 = vrot.slane %v526, %v530
        %v532 = vlaneseq
        %v533 = vshrl.u32 %v532, 7
        %v534 = vsub.s32 1, %v533
        %v535 = vrot.slane %v526, %v534
        %536 = vrot.lane.b32.xlu0 %v531, 17
        %v537 = vpop.permute.xlu0 %536
        %538 = vrot.lane.b32.xlu0 %v535, 17
        %v539 = vpop.permute.xlu0 %538
        %v540 = vsel %vm276, %v537, %v539
        %v544 = vmul.f32 %v241, %v537
        %v545 = vmul.f32 %v243, %v540
        %v546 = vmul.f32 %v241, %v539
        %550 = vrot.lane.b32.xlu0 %v544, 111
        %v551 = vpop.permute.xlu0 %550
        %552 = vrot.lane.b32.xlu0 %v545, 111
        %v553 = vpop.permute.xlu0 %552
        %554 = vrot.lane.b32.xlu0 %v546, 111
        %v555 = vpop.permute.xlu0 %554
        %v556 = vsel %vm259, %v551, %v553
        %v557 = vsel %vm259, %v553, %v555
        %560 = vst [vmem:[#allocation2 + $0x40] sm:$0xf] %v556
        %561 = vst [vmem:[#allocation2 + $0x48] sm:$0xf] %v557
        %v562 = vld [vmem:[#allocation7] sm:$0xff]
        %v563 = vld [vmem:[#allocation2] sm:$0xff]
        %v564 = vld [vmem:[#allocation2 + $0x8] sm:$0xff]
        %v565 = vld [vmem:[#allocation2 + $0x10] sm:$0xff]
        %v566 = vld [vmem:[#allocation2 + $0x18] sm:$0xff]
        %v567 = vld [vmem:[#allocation2 + $0x20] sm:$0xff]
        %v568 = vld [vmem:[#allocation2 + $0x28] sm:$0xff]
        %v569 = vld [vmem:[#allocation2 + $0x30] sm:$0xff]
        %v570 = vld [vmem:[#allocation2 + $0x38] sm:$0xff]
        %v571 = vld [vmem:[#allocation2 + $0x40] sm:$0xf]
        %v572 = vld [vmem:[#allocation2 + $0x48] sm:$0xf]
        %vm573 = vcmask 293888
        %v575 = vsel %vm573, %v562, 0
        %vm577 = vcmask 1043456
        %v579 = vsel %vm577, %v571, 0
        %v582 = vsel %vm577, %v572, 0
        %584 = vmatprep.subr.mxu0 %v564
        %585 = vmatpush1.msra.mxu0 %v563
        %586 = vmatprep.subr.mxu0 %v566
        %587 = vmatpush1.msra.mxu0 %v565
        %588 = vmatprep.subr.mxu0 %v568
        %589 = vmatpush1.msra.mxu0 %v567
        %590 = vmatprep.subr.mxu0 %v570
        %591 = vmatpush1.msra.mxu0 %v569
        %592 = vmatprep.subr.mxu0 %v582
        %593 = vmatpush1.msra.mxu0 %v579
        %594 = vmatprep.subr.mxu0 0.0
        %595 = vmatpush1.msra.mxu0 0.0
        %596 = vmatprep.subr.mxu0 0.0
        %597 = vmatpush1.msra.mxu0 0.0
        %598 = vmatprep.subr.mxu0 0.0
        %599 = vmatpush1.msra.mxu0 0.0
        %600 = vmatprep.subr.mxu0 0.0
        %601 = vmatpush1.msra.mxu0 0.0
        %602 = vmatprep.subr.mxu0 0.0
        %603 = vmatpush1.msra.mxu0 0.0
        %604 = vmatprep.subr.mxu0 0.0
        %605 = vmatpush1.msra.mxu0 0.0
        %606 = vmatprep.subr.mxu0 0.0
        %607 = vmatpush1.msra.mxu0 0.0
        %608 = vmatprep.subr.mxu0 0.0
        %609 = vmatpush1.msra.mxu0 0.0
        %610 = vmatprep.subr.mxu0 0.0
        %611 = vmatpush1.msra.mxu0 0.0
        %612 = vmatprep.subr.mxu0 0.0
        %613 = vmatpush1.msra.mxu0 0.0
        %614 = vmatprep.subr.mxu0 0.0
        %615 = vmatpush1.msra.mxu0 0.0
        %616 = vmatprep.subr.mxu0 0.0
        %617 = vmatpush1.msra.mxu0 0.0
        %618 = vmatprep.subr.mxu0 0.0
        %619 = vmatpush1.msra.mxu0 0.0
        %620 = vmatprep.subr.mxu0 0.0
        %621 = vmatpush1.msra.mxu0 0.0
        %622 = vmatprep.subr.mxu0 0.0
        %623 = vmatpush1.msra.mxu0 0.0
        %624 = vmatprep.subr.mxu0 0.0
        %625 = vmatpush1.msra.mxu0 0.0
        %626 = vmatprep.subr.mxu0 0.0
        %627 = vmatpush1.msra.mxu0 0.0
        %628 = vmatprep.subr.mxu0 0.0
        %629 = vmatpush1.msra.mxu0 0.0
        %630 = vmatprep.subr.mxu0 0.0
        %631 = vmatpush1.msra.mxu0 0.0
        %632 = vmatprep.subr.mxu0 0.0
        %633 = vmatpush1.msra.mxu0 0.0
        %634 = vmatprep.subr.mxu0 0.0
        %635 = vmatpush1.msra.mxu0 0.0
        %636 = vmatprep.subr.mxu0 0.0
        %637 = vmatpush1.msra.mxu0 0.0
        %638 = vmatprep.subr.mxu0 0.0
        %639 = vmatpush1.msra.mxu0 0.0
        %640 = vmatprep.subr.mxu0 0.0
        %641 = vmatpush1.msra.mxu0 0.0
        %642 = vmatprep.subr.mxu0 0.0
        %643 = vmatpush1.msra.mxu0 0.0
        %644 = vmatprep.subr.mxu0 0.0
        %645 = vmatpush1.msra.mxu0 0.0
        %646 = vmatprep.subr.mxu0 0.0
        %647 = vmatpush1.msra.mxu0 0.0
        %648 = vmatprep.mubr.f32.mxu0 0.0
        %649 = vmatmul.mubr.f32.gmra.mrb[0].mxu0 %v575
        %v650 = vpop.f32.mrb[0].mxu0
        %v651 = vadd.f32 0.0, %v650
        %v652 = vpop.f32.mrb[0].mxu0
        %v653 = vadd.f32 0.0, %v652
        %654 = vdwg.mxu0
        %v655 = vmax.f32 %v651, 0.0
        %v656 = vmax.f32 %v653, 0.0
        %v657 = vld [vmem:[#allocation9] ss:$8 sm:$0x3]
        %v659 = vlaneseq
        %v660 = vshrl.u32 %v659, 7
        %v661 = vsub.s32 0, %v660
        %v662 = vrot.slane %v657, %v661
        %v663 = vlaneseq
        %v664 = vshrl.u32 %v663, 7
        %v665 = vsub.s32 1, %v664
        %v666 = vrot.slane %v657, %v665
        %667 = vrot.lane.b32.xlu0 %v662, 111
        %v668 = vpop.permute.xlu0 %667
        %669 = vrot.lane.b32.xlu0 %v666, 111
        %v670 = vpop.permute.xlu0 %669
        %v671 = vsel %vm259, %v668, %v670
        %v675 = vmul.f32 %v656, %v668
        %v676 = vmul.f32 %v655, %v671
        %v677 = vmul.f32 %v656, %v670
        %681 = vrot.lane.b32.xlu0 %v675, 17
        %v682 = vpop.permute.xlu0 %681
        %683 = vrot.lane.b32.xlu0 %v676, 17
        %v684 = vpop.permute.xlu0 %683
        %685 = vrot.lane.b32.xlu0 %v677, 17
        %v686 = vpop.permute.xlu0 %685
        %v687 = vsel %vm276, %v682, %v684
        %v688 = vsel %vm276, %v684, %v686
        %691 = vst [vmem:[#allocation3] sm:$0xff] %v687
        %692 = vst [vmem:[#allocation3 + $0x8] sm:$0xff] %v688
        %v693 = vld [vmem:[%s283] ss:$8 sm:$0x3]
        %v695 = vlaneseq
        %v696 = vshrl.u32 %v695, 7
        %v697 = vsub.s32 0, %v696
        %v698 = vrot.slane %v693, %v697
        %v699 = vlaneseq
        %v700 = vshrl.u32 %v699, 7
        %v701 = vsub.s32 1, %v700
        %v702 = vrot.slane %v693, %v701
        %703 = vrot.lane.b32.xlu0 %v698, 112
        %v704 = vpop.permute.xlu0 %703
        %705 = vrot.lane.b32.xlu0 %v702, 112
        %v706 = vpop.permute.xlu0 %705
        %v707 = vsel %vm298, %v704, %v706
        %v711 = vmul.f32 %v656, %v704
        %v712 = vmul.f32 %v655, %v707
        %v713 = vmul.f32 %v656, %v706
        %717 = vrot.lane.b32.xlu0 %v711, 16
        %v718 = vpop.permute.xlu0 %717
        %719 = vrot.lane.b32.xlu0 %v712, 16
        %v720 = vpop.permute.xlu0 %719
        %721 = vrot.lane.b32.xlu0 %v713, 16
        %v722 = vpop.permute.xlu0 %721
        %v723 = vsel %vm318, %v718, %v720
        %v724 = vsel %vm318, %v720, %v722
        %727 = vst [vmem:[#allocation3 + $0x10] sm:$0xff] %v723
        %728 = vst [vmem:[#allocation3 + $0x18] sm:$0xff] %v724
        %v729 = vld [vmem:[%s325] ss:$8 sm:$0x3]
        %v731 = vlaneseq
        %v732 = vshrl.u32 %v731, 7
        %v733 = vsub.s32 0, %v732
        %v734 = vrot.slane %v729, %v733
        %v735 = vlaneseq
        %v736 = vshrl.u32 %v735, 7
        %v737 = vsub.s32 1, %v736
        %v738 = vrot.slane %v729, %v737
        %739 = vrot.lane.b32.xlu0 %v734, 113
        %v740 = vpop.permute.xlu0 %739
        %741 = vrot.lane.b32.xlu0 %v738, 113
        %v742 = vpop.permute.xlu0 %741
        %v743 = vsel %vm340, %v740, %v742
        %v747 = vmul.f32 %v656, %v740
        %v748 = vmul.f32 %v655, %v743
        %v749 = vmul.f32 %v656, %v742
        %753 = vrot.lane.b32.xlu0 %v747, 15
        %v754 = vpop.permute.xlu0 %753
        %755 = vrot.lane.b32.xlu0 %v748, 15
        %v756 = vpop.permute.xlu0 %755
        %757 = vrot.lane.b32.xlu0 %v749, 15
        %v758 = vpop.permute.xlu0 %757
        %v759 = vsel %vm357, %v754, %v756
        %v760 = vsel %vm357, %v756, %v758
        %763 = vst [vmem:[#allocation3 + $0x20] sm:$0xff] %v759
        %764 = vst [vmem:[#allocation3 + $0x28] sm:$0xff] %v760
        %v765 = vld [vmem:[%s364] ss:$8 sm:$0x3]
        %v767 = vlaneseq
        %v768 = vshrl.u32 %v767, 7
        %v769 = vsub.s32 0, %v768
        %v770 = vrot.slane %v765, %v769
        %v771 = vlaneseq
        %v772 = vshrl.u32 %v771, 7
        %v773 = vsub.s32 1, %v772
        %v774 = vrot.slane %v765, %v773
        %775 = vrot.lane.b32.xlu0 %v770, 127
        %v776 = vpop.permute.xlu0 %775
        %777 = vrot.lane.b32.xlu0 %v774, 127
        %v778 = vpop.permute.xlu0 %777
        %v779 = vsel %vm379, %v776, %v778
        %v783 = vmul.f32 %v656, %v776
        %v784 = vmul.f32 %v655, %v779
        %v785 = vmul.f32 %v656, %v778
        %789 = vrot.lane.b32.xlu0 %v783, 1
        %v790 = vpop.permute.xlu0 %789
        %791 = vrot.lane.b32.xlu0 %v784, 1
        %v792 = vpop.permute.xlu0 %791
        %793 = vrot.lane.b32.xlu0 %v785, 1
        %v794 = vpop.permute.xlu0 %793
        %v795 = vsel %vm399, %v790, %v792
        %v796 = vsel %vm399, %v792, %v794
        %799 = vst [vmem:[#allocation3 + $0x30] sm:$0xff] %v795
        %800 = vst [vmem:[#allocation3 + $0x38] sm:$0xff] %v796
        %801 = vst [vmem:[#allocation3 + $0x40] sm:$0xff] %v655
        %802 = vst [vmem:[#allocation3 + $0x48] sm:$0xff] %v656
        %v803 = vld [vmem:[%s408] ss:$8 sm:$0x3]
        %v805 = vlaneseq
        %v806 = vshrl.u32 %v805, 7
        %v807 = vsub.s32 0, %v806
        %v808 = vrot.slane %v803, %v807
        %v809 = vlaneseq
        %v810 = vshrl.u32 %v809, 7
        %v811 = vsub.s32 1, %v810
        %v812 = vrot.slane %v803, %v811
        %813 = vrot.lane.b32.xlu0 %v808, 1
        %v814 = vpop.permute.xlu0 %813
        %815 = vrot.lane.b32.xlu0 %v812, 1
        %v816 = vpop.permute.xlu0 %815
        %v817 = vsel %vm399, %v814, %v816
        %v821 = vmul.f32 %v655, %v814
        %v822 = vmul.f32 %v656, %v817
        %v823 = vmul.f32 %v655, %v816
        %827 = vrot.lane.b32.xlu0 %v821, 127
        %v828 = vpop.permute.xlu0 %827
        %829 = vrot.lane.b32.xlu0 %v822, 127
        %v830 = vpop.permute.xlu0 %829
        %831 = vrot.lane.b32.xlu0 %v823, 127
        %v832 = vpop.permute.xlu0 %831
        %v833 = vsel %vm379, %v828, %v830
        %v834 = vsel %vm379, %v830, %v832
        %837 = vst [vmem:[#allocation3 + $0x50] sm:$0xff] %v833
        %838 = vst [vmem:[#allocation3 + $0x58] sm:$0xff] %v834
        %v839 = vld [vmem:[%s448] ss:$8 sm:$0x3]
        %v841 = vlaneseq
        %v842 = vshrl.u32 %v841, 7
        %v843 = vsub.s32 0, %v842
        %v844 = vrot.slane %v839, %v843
        %v845 = vlaneseq
        %v846 = vshrl.u32 %v845, 7
        %v847 = vsub.s32 1, %v846
        %v848 = vrot.slane %v839, %v847
        %849 = vrot.lane.b32.xlu0 %v844, 15
        %v850 = vpop.permute.xlu0 %849
        %851 = vrot.lane.b32.xlu0 %v848, 15
        %v852 = vpop.permute.xlu0 %851
        %v853 = vsel %vm357, %v850, %v852
        %v857 = vmul.f32 %v655, %v850
        %v858 = vmul.f32 %v656, %v853
        %v859 = vmul.f32 %v655, %v852
        %863 = vrot.lane.b32.xlu0 %v857, 113
        %v864 = vpop.permute.xlu0 %863
        %865 = vrot.lane.b32.xlu0 %v858, 113
        %v866 = vpop.permute.xlu0 %865
        %867 = vrot.lane.b32.xlu0 %v859, 113
        %v868 = vpop.permute.xlu0 %867
        %v869 = vsel %vm340, %v864, %v866
        %v870 = vsel %vm340, %v866, %v868
        %873 = vst [vmem:[#allocation3 + $0x60] sm:$0xff] %v869
        %874 = vst [vmem:[#allocation3 + $0x68] sm:$0xff] %v870
        %v875 = vld [vmem:[%s485] ss:$8 sm:$0x3]
        %v877 = vlaneseq
        %v878 = vshrl.u32 %v877, 7
        %v879 = vsub.s32 0, %v878
        %v880 = vrot.slane %v875, %v879
        %v881 = vlaneseq
        %v882 = vshrl.u32 %v881, 7
        %v883 = vsub.s32 1, %v882
        %v884 = vrot.slane %v875, %v883
        %885 = vrot.lane.b32.xlu0 %v880, 16
        %v886 = vpop.permute.xlu0 %885
        %887 = vrot.lane.b32.xlu0 %v884, 16
        %v888 = vpop.permute.xlu0 %887
        %v889 = vsel %vm318, %v886, %v888
        %v893 = vmul.f32 %v655, %v886
        %v894 = vmul.f32 %v656, %v889
        %v895 = vmul.f32 %v655, %v888
        %899 = vrot.lane.b32.xlu0 %v893, 112
        %v900 = vpop.permute.xlu0 %899
        %901 = vrot.lane.b32.xlu0 %v894, 112
        %v902 = vpop.permute.xlu0 %901
        %903 = vrot.lane.b32.xlu0 %v895, 112
        %v904 = vpop.permute.xlu0 %903
        %v905 = vsel %vm298, %v900, %v902
        %v906 = vsel %vm298, %v902, %v904
        %909 = vst [vmem:[#allocation3 + $0x70] sm:$0xff] %v905
        %910 = vst [vmem:[#allocation3 + $0x78] sm:$0xff] %v906
        %v911 = vld [vmem:[%s525] ss:$8 sm:$0x3]
        %v913 = vlaneseq
        %v914 = vshrl.u32 %v913, 7
        %v915 = vsub.s32 0, %v914
        %v916 = vrot.slane %v911, %v915
        %v917 = vlaneseq
        %v918 = vshrl.u32 %v917, 7
        %v919 = vsub.s32 1, %v918
        %v920 = vrot.slane %v911, %v919
        %921 = vrot.lane.b32.xlu0 %v916, 17
        %v922 = vpop.permute.xlu0 %921
        %923 = vrot.lane.b32.xlu0 %v920, 17
        %v924 = vpop.permute.xlu0 %923
        %v925 = vsel %vm276, %v922, %v924
        %v929 = vmul.f32 %v655, %v922
        %v930 = vmul.f32 %v656, %v925
        %v931 = vmul.f32 %v655, %v924
        %935 = vrot.lane.b32.xlu0 %v929, 111
        %v936 = vpop.permute.xlu0 %935
        %937 = vrot.lane.b32.xlu0 %v930, 111
        %v938 = vpop.permute.xlu0 %937
        %939 = vrot.lane.b32.xlu0 %v931, 111
        %v940 = vpop.permute.xlu0 %939
        %v941 = vsel %vm259, %v936, %v938
        %v942 = vsel %vm259, %v938, %v940
        %945 = vst [vmem:[#allocation3 + $0x80] sm:$0xff] %v941
        %946 = vst [vmem:[#allocation3 + $0x88] sm:$0xff] %v942
        %v947 = vld [vmem:[%s2] sm:$0xf]
        %v948 = vld [vmem:[#allocation3] sm:$0xff]
        %v949 = vld [vmem:[#allocation3 + $0x8] sm:$0xff]
        %v950 = vld [vmem:[#allocation3 + $0x10] sm:$0xff]
        %v951 = vld [vmem:[#allocation3 + $0x18] sm:$0xff]
        %v952 = vld [vmem:[#allocation3 + $0x20] sm:$0xff]
        %v953 = vld [vmem:[#allocation3 + $0x28] sm:$0xff]
        %v954 = vld [vmem:[#allocation3 + $0x30] sm:$0xff]
        %v955 = vld [vmem:[#allocation3 + $0x38] sm:$0xff]
        %v956 = vld [vmem:[#allocation3 + $0x40] sm:$0xff]
        %v957 = vld [vmem:[#allocation3 + $0x48] sm:$0xff]
        %v958 = vld [vmem:[#allocation3 + $0x50] sm:$0xff]
        %v959 = vld [vmem:[#allocation3 + $0x58] sm:$0xff]
        %v960 = vld [vmem:[#allocation3 + $0x60] sm:$0xff]
        %v961 = vld [vmem:[#allocation3 + $0x68] sm:$0xff]
        %v962 = vld [vmem:[#allocation3 + $0x70] sm:$0xff]
        %v963 = vld [vmem:[#allocation3 + $0x78] sm:$0xff]
        %v964 = vld [vmem:[#allocation3 + $0x80] sm:$0xff]
        %v965 = vld [vmem:[#allocation3 + $0x88] sm:$0xff]
        %vm966 = vcmask 588800
        %v968 = vsel %vm966, %v947, 0
        %970 = vmatprep.subr.mxu0 %v949
        %971 = vmatpush1.msra.mxu0 %v948
        %972 = vmatprep.subr.mxu0 %v951
        %973 = vmatpush1.msra.mxu0 %v950
        %974 = vmatprep.subr.mxu0 %v953
        %975 = vmatpush1.msra.mxu0 %v952
        %976 = vmatprep.subr.mxu0 %v955
        %977 = vmatpush1.msra.mxu0 %v954
        %978 = vmatprep.subr.mxu0 %v957
        %979 = vmatpush1.msra.mxu0 %v956
        %980 = vmatprep.subr.mxu0 %v959
        %981 = vmatpush1.msra.mxu0 %v958
        %982 = vmatprep.subr.mxu0 %v961
        %983 = vmatpush1.msra.mxu0 %v960
        %984 = vmatprep.subr.mxu0 %v963
        %985 = vmatpush1.msra.mxu0 %v962
        %986 = vmatprep.subr.mxu0 %v965
        %987 = vmatpush1.msra.mxu0 %v964
        %988 = vmatprep.subr.mxu0 0.0
        %989 = vmatpush1.msra.mxu0 0.0
        %990 = vmatprep.subr.mxu0 0.0
        %991 = vmatpush1.msra.mxu0 0.0
        %992 = vmatprep.subr.mxu0 0.0
        %993 = vmatpush1.msra.mxu0 0.0
        %994 = vmatprep.subr.mxu0 0.0
        %995 = vmatpush1.msra.mxu0 0.0
        %996 = vmatprep.subr.mxu0 0.0
        %997 = vmatpush1.msra.mxu0 0.0
        %998 = vmatprep.subr.mxu0 0.0
        %999 = vmatpush1.msra.mxu0 0.0
        %1000 = vmatprep.subr.mxu0 0.0
        %1001 = vmatpush1.msra.mxu0 0.0
        %1002 = vmatprep.subr.mxu0 0.0
        %1003 = vmatpush1.msra.mxu0 0.0
        %1004 = vmatprep.subr.mxu0 0.0
        %1005 = vmatpush1.msra.mxu0 0.0
        %1006 = vmatprep.subr.mxu0 0.0
        %1007 = vmatpush1.msra.mxu0 0.0
        %1008 = vmatprep.subr.mxu0 0.0
        %1009 = vmatpush1.msra.mxu0 0.0
        %1010 = vmatprep.subr.mxu0 0.0
        %1011 = vmatpush1.msra.mxu0 0.0
        %1012 = vmatprep.subr.mxu0 0.0
        %1013 = vmatpush1.msra.mxu0 0.0
        %1014 = vmatprep.subr.mxu0 0.0
        %1015 = vmatpush1.msra.mxu0 0.0
        %1016 = vmatprep.subr.mxu0 0.0
        %1017 = vmatpush1.msra.mxu0 0.0
        %1018 = vmatprep.subr.mxu0 0.0
        %1019 = vmatpush1.msra.mxu0 0.0
        %1020 = vmatprep.subr.mxu0 0.0
        %1021 = vmatpush1.msra.mxu0 0.0
        %1022 = vmatprep.subr.mxu0 0.0
        %1023 = vmatpush1.msra.mxu0 0.0
        %1024 = vmatprep.subr.mxu0 0.0
        %1025 = vmatpush1.msra.mxu0 0.0
        %1026 = vmatprep.subr.mxu0 0.0
        %1027 = vmatpush1.msra.mxu0 0.0
        %1028 = vmatprep.subr.mxu0 0.0
        %1029 = vmatpush1.msra.mxu0 0.0
        %1030 = vmatprep.subr.mxu0 0.0
        %1031 = vmatpush1.msra.mxu0 0.0
        %1032 = vmatprep.subr.mxu0 0.0
        %1033 = vmatpush1.msra.mxu0 0.0
        %1034 = vmatprep.mubr.f32.mxu0 0.0
        %1035 = vmatmul.mubr.f32.gmra.mrb[0].mxu0 %v968
        %v1036 = vpop.f32.mrb[0].mxu0
        %v1037 = vadd.f32 0.0, %v1036
        %v1038 = vpop.f32.mrb[0].mxu0
        %v1039 = vadd.f32 0.0, %v1038
        %1040 = vdwg.mxu0
        %v1041 = vmul.f32 %v1037, 0.5
        %v1042 = vmul.f32 %v1039, 0.5
        %v1043 = vadd.f32 %v1041, %v241
        %v1044 = vadd.f32 %v1042, %v243
        %v1047 = vcombine.low %v1043, %v1044
        %1049 = vst [vmem:[%s240] sm:$0xff] %v1047
        %s1050 = sand.u32 %s119, 1
        %s1051 = scalar_lea.sflag [#allocation6], %s1050
        %s1052 = sand.u32 %s119, 1
        %s1053 = smul.addr %s1052, 8
        %s1054 = scalar_lea.vmem [#allocation10], %s1053
        // Predicated region
        $region49: #{tpu_custom_call.1} parent=35 // pred_check
          %p1055 = pneg %p129
        $region50: #{tpu_custom_call.1} parent=35 // pred_check_branch
          %1057 = sbr.rel (%p1055) target = $region52
        $region51: #{tpu_custom_call.1} parent=35 // pred_region
          %s1059 = ssub.s32 128, 128
          %1060 = vsyncadd %s1051, %s1059
          %s1061 = smul.addr %s22, 2
          %s1062 = smul.addr %s1061, 64
          %s1063 = scalar_lea.hbm %s4, %s1062
          %s1065 = sshll.u32 %s1054, 4
          %s1066 = int_to_ptr.vmem [resolvable:$true] %s1065
          %1068 = dma.vmem_to_hbm [thread:$0]  %s1066, 128, %s1063, %s1051
        $region52: #{tpu_custom_call.1} parent=35 // pred_fallthru
          _
      $region36: #{tpu_custom_call.1} parent=5 // pred_fallthru
        _
      %p1069 = scmp.le.s32.totalorder 2, %s17
      // Predicated region
      $region53: #{tpu_custom_call.1} parent=5 // pred_check
        %p1070 = pneg %p1069
      $region54: #{tpu_custom_call.1} parent=5 // pred_check_branch
        %1072 = sbr.rel (%p1070) target = $region56
      $region55: #{tpu_custom_call.1} parent=5 // pred_region
        %s1073 = ssub.s32 %s17, 2
        // Predicated region
        $region57: #{tpu_custom_call.1} parent=55 // pred_check
          %p1074 = pneg %p135
        $region58: #{tpu_custom_call.1} parent=55 // pred_check_branch
          %1076 = sbr.rel (%p1074) target = $region60
        $region59: #{tpu_custom_call.1} parent=55 // pred_region
          %s1077 = sand.u32 %s120, 1
          %s1078 = scalar_lea.sflag [#allocation6], %s1077
          %s1079 = sand.u32 %s120, 1
          %s1080 = smul.addr %s1079, 8
          %s1081 = scalar_lea.vmem [#allocation10], %s1080
          %1082 = dma.done %s1078, 128
        $region60: #{tpu_custom_call.1} parent=55 // pred_fallthru
          _
      $region56: #{tpu_custom_call.1} parent=5 // pred_fallthru
        _
    $region6: #{tpu_custom_call.1} parent=1 // loop_footer
      %s21 = sadd.s32 1, %s17
    $region7: #{tpu_custom_call.1} parent=1 // loop_footer_branch
      %16 = sbr.rel target = $region3
    $region8: #{tpu_custom_call.1} parent=1 // loop_exit
      _
    %1083 = vsyncpa [#allocation5], 1
    %s1084 = scalar_lea.sflag [#allocation5], 1
    %1085 = vsyncpa %s1084, 1
    %1086 = vsyncpa [#allocation8], 1
    %1087 = vsyncpa [#allocation6], 1
    %s1088 = scalar_lea.sflag [#allocation6], 1
    %1089 = vsyncpa %s1088, 1

</llo_original>
